<compile_context>
chip_gen: v6e
topology: v6e:2x2x1
jax: 0.10.0
libtpu: 0.0.40
codegen_flags: <defaults>
</compile_context>

<pallas_src>
import functools
import math

import jax
import jax.numpy as jnp
from jax import lax
from jax.experimental import pallas as pl
from jax.experimental.pallas import tpu as pltpu


def _attention_kernel(h_ref, res_ref, wqkv_ref, bqkv_ref, wo_ref, bo_ref,
                      out_ref, attnw_ref, acc_ref, *, head_dim):
    """One grid step == (batch element b, attention head h)."""
    D = head_dim
    h_idx = pl.program_id(1)

    x = h_ref[0].astype(jnp.bfloat16)                            # [T, E]

    # Fused Q|K|V projection for this head: [T, E] @ [E, 3D], bf16 in / f32 acc.
    qkv = jnp.dot(x, wqkv_ref[0], preferred_element_type=jnp.float32)
    qkv = qkv + bqkv_ref[0]                                      # [T, 3D] f32
    q = qkv[:, 0:D].astype(jnp.bfloat16)       # scaling already folded into Wq/bq
    k = qkv[:, D:2 * D].astype(jnp.bfloat16)
    v = qkv[:, 2 * D:3 * D].astype(jnp.bfloat16)

    # Attention scores [T, S] = q @ k^T on the MXU (NT dot), f32 accumulation.
    scores = lax.dot_general(q, k, (((1,), (1,)), ((), ())),
                             preferred_element_type=jnp.float32)

    # Numerically stable softmax in f32; reciprocal goes to the EUP slot.
    m = jnp.max(scores, axis=-1, keepdims=True)
    e = jnp.exp(scores - m)
    probs = e * pl.reciprocal(jnp.sum(e, axis=-1, keepdims=True), approx=True)

    attnw_ref[0, 0] = probs.astype(attnw_ref.dtype)              # [T, S]

    # Per-head context: [T, S] @ [S, D], bf16 in / f32 acc.
    ctx = jnp.dot(probs.astype(jnp.bfloat16), v,
                  preferred_element_type=jnp.float32)            # [T, D]

    # This head's slice of the output projection: [T, D] @ [D, E].
    partial = jnp.dot(ctx.astype(jnp.bfloat16), wo_ref[0],
                      preferred_element_type=jnp.float32)        # [T, E]

    @pl.when(h_idx == 0)
    def _():
        # Fold output bias + residual into the accumulator init.
        acc_ref[...] = res_ref[0].astype(jnp.float32) + bo_ref[...]

    acc_ref[...] += partial

    @pl.when(h_idx == pl.num_programs(1) - 1)
    def _():
        out_ref[0] = acc_ref[...].astype(out_ref.dtype)


def alexa_tm_attention(hidden_states, before_layer_norm_states, params, num_heads):
    """AlexaTMAttention.forward (self-attn, no masks, eval, output_attentions=True).

    hidden_states / before_layer_norm_states: [B, T, E] float32.
    params: pre-transposed Linear weights ([in, out]) and biases ([1, out]):
      wq/bq, wk/bk, wv/bv (AlexaTMSelfAttention.query/key/value),
      wo/bo (AlexaTMSelfOutput.dense).
    Returns (attention_output [B, T, E], attention_probs [B, H, T, T]).
    """
    B, T, E = hidden_states.shape
    H = num_heads
    D = E // H
    scaling = 1.0 / math.sqrt(D)

    # ---- host-side (trace-time) weight re-layout ----------------------------
    def per_head(w):                       # [E, E] (in, out) -> [H, E, D]
        return w.reshape(E, H, D).transpose(1, 0, 2)

    # Fused per-head Q|K|V weight [H, E, 3D]; scaling baked into the Q columns;
    # bf16 for the MXU fast path.
    wqkv = jnp.concatenate(
        [per_head(params['wq'] * scaling),
         per_head(params['wk']),
         per_head(params['wv'])], axis=-1).astype(jnp.bfloat16)        # [H, E, 3D]
    bqkv = jnp.concatenate(
        [(params['bq'] * scaling).reshape(H, D),
         params['bk'].reshape(H, D),
         params['bv'].reshape(H, D)], axis=-1).reshape(H, 1, 3 * D)     # f32
    wo = params['wo'].reshape(H, D, E).astype(jnp.bfloat16)             # [H, D, E]
    bo = params['bo']                                                   # [1, E] f32

    kernel = functools.partial(_attention_kernel, head_dim=D)

    out, attnw = pl.pallas_call(
        kernel,
        out_shape=(jax.ShapeDtypeStruct((B, T, E), hidden_states.dtype),
                   jax.ShapeDtypeStruct((B, H, T, T), hidden_states.dtype)),
        grid_spec=pltpu.PrefetchScalarGridSpec(
            num_scalar_prefetch=0,
            grid=(B, H),                               # head (reduction) axis last
            in_specs=[
                pl.BlockSpec((1, T, E), lambda b, h: (b, 0, 0)),       # hidden
                pl.BlockSpec((1, T, E), lambda b, h: (b, 0, 0)),       # residual
                pl.BlockSpec((1, E, 3 * D), lambda b, h: (h, 0, 0)),   # fused Wqkv
                pl.BlockSpec((1, 1, 3 * D), lambda b, h: (h, 0, 0)),   # fused bqkv
                pl.BlockSpec((1, D, E), lambda b, h: (h, 0, 0)),       # Wo head rows
                pl.BlockSpec((1, E), lambda b, h: (0, 0)),             # bo
            ],
            out_specs=[
                pl.BlockSpec((1, T, E), lambda b, h: (b, 0, 0)),        # resident over h
                pl.BlockSpec((1, 1, T, T), lambda b, h: (b, h, 0, 0)),  # attn probs
            ],
            scratch_shapes=[pltpu.VMEM((T, E), jnp.float32)],           # out-proj acc
        ),
        compiler_params=pltpu.CompilerParams(
            dimension_semantics=("parallel", "arbitrary")),
    )(hidden_states, before_layer_norm_states, wqkv, bqkv, wo, bo)

    return out, attnw


def _reference(hidden_states, before_layer_norm_states, params, num_heads):
    """Pure-JAX f32 reference mirroring the PyTorch forward exactly."""
    B, T, E = hidden_states.shape
    H = num_heads
    D = E // H
    scaling = 1.0 / math.sqrt(D)

    def lin(x, w, b):
        return x @ w + b[0]

    q = lin(hidden_states, params['wq'], params['bq'])
    k = lin(hidden_states, params['wk'], params['bk'])
    v = lin(hidden_states, params['wv'], params['bv'])

    def shape(x):
        return x.reshape(B, T, H, D).transpose(0, 2, 1, 3)

    qh, kh, vh = shape(q), shape(k), shape(v)
    scores = jnp.einsum('bhtd,bhsd->bhts', qh, kh) * scaling
    probs = jax.nn.softmax(scores, axis=-1)
    ctx = jnp.einsum('bhts,bhsd->bhtd', probs, vh)
    ctx = ctx.transpose(0, 2, 1, 3).reshape(B, T, E)
    out = lin(ctx, params['wo'], params['bo']) + before_layer_norm_states
    return out, probs


if __name__ == "__main__":
    B, T, E, H = 2, 8, 32, 4
    key = jax.random.PRNGKey(0)
    ks = jax.random.split(key, 10)

    hidden_states = jax.random.normal(ks[0], (B, T, E), dtype=jnp.float32)
    before_ln = jax.random.normal(ks[9], (B, T, E), dtype=jnp.float32)

    # Deterministic parameter init (uniform, nn.Linear-like scale).
    bound = 1.0 / math.sqrt(E)
    def init_w(k):
        return jax.random.uniform(k, (E, E), jnp.float32, -bound, bound)
    def init_b(k):
        return jax.random.uniform(k, (1, E), jnp.float32, -bound, bound)

    params = {
        'wq': init_w(ks[1]), 'bq': init_b(ks[2]),
        'wk': init_w(ks[3]), 'bk': init_b(ks[4]),
        'wv': init_w(ks[5]), 'bv': init_b(ks[6]),
        'wo': init_w(ks[7]), 'bo': init_b(ks[8]),
    }

    out, attnw = alexa_tm_attention(hidden_states, before_ln, params, H)
    out = jax.block_until_ready(out)
    attnw = jax.block_until_ready(attnw)

    ref_out, ref_attnw = _reference(hidden_states, before_ln, params, H)

    # bf16 matmuls (f32 accumulation) + approx reciprocal => looser tolerance
    # than a pure-f32 pipeline.
    assert jnp.allclose(out, ref_out, atol=2e-2, rtol=2e-2), \
        float(jnp.max(jnp.abs(out - ref_out)))
    assert jnp.allclose(attnw, ref_attnw, atol=2e-2, rtol=2e-2), \
        float(jnp.max(jnp.abs(attnw - ref_attnw)))

    print("KERNEL_OK")
</pallas_src>

<mosaic_0001>
module attributes {stable_mosaic.version = 11 : i64} {
  func.func @_attention_kernel(%arg0: i32, %arg1: i32, %arg2: memref<1x8x32xf32, #tpu.memory_space<vmem>>, %arg3: memref<1x8x32xf32, #tpu.memory_space<vmem>>, %arg4: memref<1x32x24xbf16, #tpu.memory_space<vmem>>, %arg5: memref<1x1x24xf32, #tpu.memory_space<vmem>>, %arg6: memref<1x8x32xbf16, #tpu.memory_space<vmem>>, %arg7: memref<1x32xf32, #tpu.memory_space<vmem>>, %arg8: memref<1x8x32xf32, #tpu.memory_space<vmem>>, %arg9: memref<1x1x8x8xf32, #tpu.memory_space<vmem>>, %arg10: memref<8x32xf32, #tpu.memory_space<vmem>>) attributes {dimension_semantics = [#tpu.dimension_semantics<parallel>, #tpu.dimension_semantics<arbitrary>], iteration_bounds = array<i64: 2, 4>, scalar_prefetch = 0 : i64, scratch_operands = 1 : i64, tpu.core_type = #tpu.core_type<tc>, window_params = [{transform_indices = @transform_0, window_bounds = array<i64: 1, 8, 32>}, {transform_indices = @transform_1, window_bounds = array<i64: 1, 8, 32>}, {transform_indices = @transform_2, window_bounds = array<i64: 1, 32, 24>}, {transform_indices = @transform_3, window_bounds = array<i64: 1, 1, 24>}, {transform_indices = @transform_4, window_bounds = array<i64: 1, 8, 32>}, {pipeline_mode = #tpu.pipeline_mode<synchronous>, transform_indices = @transform_5, window_bounds = array<i64: 1, 32>}, {transform_indices = @transform_6, window_bounds = array<i64: 1, 8, 32>}, {transform_indices = @transform_7, window_bounds = array<i64: 1, 1, 8, 8>}]} {
    %c0 = arith.constant 0 : index
    %c0_0 = arith.constant 0 : index
    %c0_1 = arith.constant 0 : index
    %0 = vector.load %arg2[%c0, %c0_0, %c0_1] : memref<1x8x32xf32, #tpu.memory_space<vmem>>, vector<1x8x32xf32>
    %1 = vector.shape_cast %0 : vector<1x8x32xf32> to vector<8x32xf32>
    %2 = arith.truncf %1 : vector<8x32xf32> to vector<8x32xbf16>
    %c0_2 = arith.constant 0 : index
    %c0_3 = arith.constant 0 : index
    %c0_4 = arith.constant 0 : index
    %3 = vector.load %arg4[%c0_2, %c0_3, %c0_4] : memref<1x32x24xbf16, #tpu.memory_space<vmem>>, vector<1x32x24xbf16>
    %4 = vector.shape_cast %3 : vector<1x32x24xbf16> to vector<32x24xbf16>
    %cst = arith.constant dense<0.000000e+00> : vector<8x24xf32>
    %5 = tpu.matmul %2, %4, %cst {dimension_numbers = #tpu.dot_dimension_numbers<[1], [0], [0], [1], [0, 0, 1, 1], [], []>} : vector<8x32xbf16>, vector<32x24xbf16>, vector<8x24xf32> -> vector<8x24xf32>
    %c0_5 = arith.constant 0 : index
    %c0_6 = arith.constant 0 : index
    %c0_7 = arith.constant 0 : index
    %6 = vector.load %arg5[%c0_5, %c0_6, %c0_7] : memref<1x1x24xf32, #tpu.memory_space<vmem>>, vector<1x1x24xf32>
    %7 = vector.shape_cast %6 : vector<1x1x24xf32> to vector<1x24xf32>
    %8 = vector.broadcast %7 : vector<1x24xf32> to vector<8x24xf32>
    %9 = arith.addf %5, %8 : vector<8x24xf32>
    %10 = vector.extract_strided_slice %9 {offsets = [0, 0], sizes = [8, 8], strides = [1, 1]} : vector<8x24xf32> to vector<8x8xf32>
    %11 = arith.truncf %10 : vector<8x8xf32> to vector<8x8xbf16>
    %12 = vector.extract_strided_slice %9 {offsets = [0, 8], sizes = [8, 8], strides = [1, 1]} : vector<8x24xf32> to vector<8x8xf32>
    %13 = arith.truncf %12 : vector<8x8xf32> to vector<8x8xbf16>
    %14 = vector.extract_strided_slice %9 {offsets = [0, 16], sizes = [8, 8], strides = [1, 1]} : vector<8x24xf32> to vector<8x8xf32>
    %15 = arith.truncf %14 : vector<8x8xf32> to vector<8x8xbf16>
    %cst_8 = arith.constant dense<0.000000e+00> : vector<8x8xf32>
    %16 = tpu.matmul %11, %13, %cst_8 {dimension_numbers = #tpu.dot_dimension_numbers<[1], [1], [0], [0], [0, 0, 1, 0], [], []>} : vector<8x8xbf16>, vector<8x8xbf16>, vector<8x8xf32> -> vector<8x8xf32>
    %cst_9 = arith.constant dense<0xFF800000> : vector<8xf32>
    %17 = vector.multi_reduction <maximumf>, %16, %cst_9 [1] : vector<8x8xf32> to vector<8xf32>
    %18 = vector.shape_cast %17 : vector<8xf32> to vector<8x1xf32>
    %19 = vector.broadcast %18 : vector<8x1xf32> to vector<8x8xf32>
    %20 = arith.subf %16, %19 : vector<8x8xf32>
    %21 = math.exp %20 : vector<8x8xf32>
    %cst_10 = arith.constant dense<0.000000e+00> : vector<8xf32>
    %22 = vector.multi_reduction <add>, %21, %cst_10 [1] : vector<8x8xf32> to vector<8xf32>
    %23 = vector.shape_cast %22 : vector<8xf32> to vector<8x1xf32>
    %24 = tpu.reciprocal %23 {approx = true} : vector<8x1xf32> -> vector<8x1xf32>
    %25 = vector.broadcast %24 : vector<8x1xf32> to vector<8x8xf32>
    %26 = arith.mulf %21, %25 : vector<8x8xf32>
    %c0_11 = arith.constant 0 : index
    %c0_12 = arith.constant 0 : index
    %c0_13 = arith.constant 0 : index
    %c0_14 = arith.constant 0 : index
    %27 = vector.load %arg9[%c0_11, %c0_12, %c0_13, %c0_14] : memref<1x1x8x8xf32, #tpu.memory_space<vmem>>, vector<1x1x8x8xf32>
    %28 = vector.shape_cast %27 : vector<1x1x8x8xf32> to vector<8x8xf32>
    %29 = vector.shape_cast %26 : vector<8x8xf32> to vector<1x1x8x8xf32>
    tpu.vector_store %arg9[%c0_11, %c0_12, %c0_13, %c0_14], %29 {strides = array<i32>} : memref<1x1x8x8xf32, #tpu.memory_space<vmem>>, vector<1x1x8x8xf32>,
    %30 = arith.truncf %26 : vector<8x8xf32> to vector<8x8xbf16>
    %cst_15 = arith.constant dense<0.000000e+00> : vector<8x8xf32>
    %31 = tpu.matmul %30, %15, %cst_15 {dimension_numbers = #tpu.dot_dimension_numbers<[1], [0], [0], [1], [0, 0, 1, 1], [], []>} : vector<8x8xbf16>, vector<8x8xbf16>, vector<8x8xf32> -> vector<8x8xf32>
    %32 = arith.truncf %31 : vector<8x8xf32> to vector<8x8xbf16>
    %c0_16 = arith.constant 0 : index
    %c0_17 = arith.constant 0 : index
    %c0_18 = arith.constant 0 : index
    %33 = vector.load %arg6[%c0_16, %c0_17, %c0_18] : memref<1x8x32xbf16, #tpu.memory_space<vmem>>, vector<1x8x32xbf16>
    %34 = vector.shape_cast %33 : vector<1x8x32xbf16> to vector<8x32xbf16>
    %cst_19 = arith.constant dense<0.000000e+00> : vector<8x32xf32>
    %35 = tpu.matmul %32, %34, %cst_19 {dimension_numbers = #tpu.dot_dimension_numbers<[1], [0], [0], [1], [0, 0, 1, 1], [], []>} : vector<8x8xbf16>, vector<8x32xbf16>, vector<8x32xf32> -> vector<8x32xf32>
    %c0_i32 = arith.constant 0 : i32
    %36 = arith.cmpi eq, %arg1, %c0_i32 : i32
    %37 = arith.extui %36 : i1 to i32
    %c0_i32_20 = arith.constant 0 : i32
    %38 = arith.cmpi ne, %37, %c0_i32_20 : i32
    scf.if %38 {
      %c0_26 = arith.constant 0 : index
      %c0_27 = arith.constant 0 : index
      %c0_28 = arith.constant 0 : index
      %45 = vector.load %arg3[%c0_26, %c0_27, %c0_28] : memref<1x8x32xf32, #tpu.memory_space<vmem>>, vector<1x8x32xf32>
      %46 = vector.shape_cast %45 : vector<1x8x32xf32> to vector<8x32xf32>
      %c0_29 = arith.constant 0 : index
      %c0_30 = arith.constant 0 : index
      %47 = vector.load %arg7[%c0_29, %c0_30] : memref<1x32xf32, #tpu.memory_space<vmem>>, vector<1x32xf32>
      %48 = vector.broadcast %47 : vector<1x32xf32> to vector<8x32xf32>
      %49 = arith.addf %46, %48 : vector<8x32xf32>
      %c0_31 = arith.constant 0 : index
      %c0_32 = arith.constant 0 : index
      %50 = vector.load %arg10[%c0_31, %c0_32] : memref<8x32xf32, #tpu.memory_space<vmem>>, vector<8x32xf32>
      tpu.vector_store %arg10[%c0_31, %c0_32], %49 {strides = array<i32>} : memref<8x32xf32, #tpu.memory_space<vmem>>, vector<8x32xf32>,
    } else {
    }
    %c0_21 = arith.constant 0 : index
    %c0_22 = arith.constant 0 : index
    %39 = vector.load %arg10[%c0_21, %c0_22] : memref<8x32xf32, #tpu.memory_space<vmem>>, vector<8x32xf32>
    %40 = arith.addf %39, %35 : vector<8x32xf32>
    %c0_23 = arith.constant 0 : index
    %c0_24 = arith.constant 0 : index
    %41 = vector.load %arg10[%c0_23, %c0_24] : memref<8x32xf32, #tpu.memory_space<vmem>>, vector<8x32xf32>
    tpu.vector_store %arg10[%c0_23, %c0_24], %40 {strides = array<i32>} : memref<8x32xf32, #tpu.memory_space<vmem>>, vector<8x32xf32>,
    %c3_i32 = arith.constant 3 : i32
    %42 = arith.cmpi eq, %arg1, %c3_i32 : i32
    %43 = arith.extui %42 : i1 to i32
    %c0_i32_25 = arith.constant 0 : i32
    %44 = arith.cmpi ne, %43, %c0_i32_25 : i32
    scf.if %44 {
      %c0_26 = arith.constant 0 : index
      %c0_27 = arith.constant 0 : index
      %45 = vector.load %arg10[%c0_26, %c0_27] : memref<8x32xf32, #tpu.memory_space<vmem>>, vector<8x32xf32>
      %c0_28 = arith.constant 0 : index
      %c0_29 = arith.constant 0 : index
      %c0_30 = arith.constant 0 : index
      %46 = vector.load %arg8[%c0_28, %c0_29, %c0_30] : memref<1x8x32xf32, #tpu.memory_space<vmem>>, vector<1x8x32xf32>
      %47 = vector.shape_cast %46 : vector<1x8x32xf32> to vector<8x32xf32>
      %48 = vector.shape_cast %45 : vector<8x32xf32> to vector<1x8x32xf32>
      tpu.vector_store %arg8[%c0_28, %c0_29, %c0_30], %48 {strides = array<i32>} : memref<1x8x32xf32, #tpu.memory_space<vmem>>, vector<1x8x32xf32>,
    } else {
    }
    return
  }
  func.func @transform_0(%arg0: i32, %arg1: i32) -> (i32, i32, i32) {
    %c0_i32 = arith.constant 0 : i32
    %c0_i32_0 = arith.constant 0 : i32
    %c0_i32_1 = arith.constant 0 : i32
    return %arg0, %c0_i32, %c0_i32_0 : i32, i32, i32
  }
  func.func @transform_1(%arg0: i32, %arg1: i32) -> (i32, i32, i32) {
    %c0_i32 = arith.constant 0 : i32
    %c0_i32_0 = arith.constant 0 : i32
    %c0_i32_1 = arith.constant 0 : i32
    return %arg0, %c0_i32, %c0_i32_0 : i32, i32, i32
  }
  func.func @transform_2(%arg0: i32, %arg1: i32) -> (i32, i32, i32) {
    %c0_i32 = arith.constant 0 : i32
    %c0_i32_0 = arith.constant 0 : i32
    %c0_i32_1 = arith.constant 0 : i32
    return %arg1, %c0_i32, %c0_i32_0 : i32, i32, i32
  }
  func.func @transform_3(%arg0: i32, %arg1: i32) -> (i32, i32, i32) {
    %c0_i32 = arith.constant 0 : i32
    %c0_i32_0 = arith.constant 0 : i32
    %c0_i32_1 = arith.constant 0 : i32
    return %arg1, %c0_i32, %c0_i32_0 : i32, i32, i32
  }
  func.func @transform_4(%arg0: i32, %arg1: i32) -> (i32, i32, i32) {
    %c0_i32 = arith.constant 0 : i32
    %c0_i32_0 = arith.constant 0 : i32
    %c0_i32_1 = arith.constant 0 : i32
    return %arg1, %c0_i32, %c0_i32_0 : i32, i32, i32
  }
  func.func @transform_5(%arg0: i32, %arg1: i32) -> (i32, i32) {
    %c0_i32 = arith.constant 0 : i32
    %c0_i32_0 = arith.constant 0 : i32
    %c0_i32_1 = arith.constant 0 : i32
    return %c0_i32, %c0_i32_0 : i32, i32
  }
  func.func @transform_6(%arg0: i32, %arg1: i32) -> (i32, i32, i32) {
    %c0_i32 = arith.constant 0 : i32
    %c0_i32_0 = arith.constant 0 : i32
    %c0_i32_1 = arith.constant 0 : i32
    return %arg0, %c0_i32, %c0_i32_0 : i32, i32, i32
  }
  func.func @transform_7(%arg0: i32, %arg1: i32) -> (i32, i32, i32, i32) {
    %c0_i32 = arith.constant 0 : i32
    %c0_i32_0 = arith.constant 0 : i32
    %c0_i32_1 = arith.constant 0 : i32
    return %arg0, %arg1, %c0_i32, %c0_i32_0 : i32, i32, i32, i32
  }
}

</mosaic_0001>

<llo_original>
// kernel: tpu_custom_call.1
$region0: #{tpu_custom_call.1}
  #allocation0 [shape = 'u32[]', space=smem, size = 0x4, offset = 0x4, fixed_abs, tag = 'smem constant byte address 0x4 - core index']
  #allocation1 [shape = 'u32[144,128]{1,0:T(1,128)}', space=vmem, size = 0x12000, scoped, tag = 'internal scratch']
  #allocation2 [shape = 'f32[8,32]{1,0:T(8,128)}', space=vmem, size = 0x1000, scoped, tag = 'scratch operand']
  %s0 = inlined_call_operand.vmem [shape: f32[2,8,32], index: 0, kind: input, shape index: {}]
  %s1 = inlined_call_operand.vmem [shape: f32[2,8,32], index: 1, kind: input, shape index: {}]
  %s2 = inlined_call_operand.vmem [shape: bf16[4,32,24], index: 2, kind: input, shape index: {}]
  %s3 = inlined_call_operand.vmem [shape: f32[4,1,24], index: 3, kind: input, shape index: {}]
  %s4 = inlined_call_operand.vmem [shape: bf16[4,8,32], index: 4, kind: input, shape index: {}]
  %s5 = inlined_call_operand.vmem [shape: f32[1,32], index: 5, kind: input, shape index: {}]
  %s6 = inlined_call_operand.hbm [shape: f32[2,8,32], index: 6, kind: output, shape index: {0}]
  %s7 = inlined_call_operand.hbm [shape: f32[2,4,8,8], index: 7, kind: output, shape index: {1}]
  %8 = xla_tuple %s6, %s7
  %s9 = sld [smem:[#allocation0]]
  $region73: #{tpu_custom_call.1} parent=0
    _
  %s11 = ssub.s32 1, %s9
  %s12 = scalar_select 0, %s11, %s9
  $region1: #{tpu_custom_call.1} parent=0
    #allocation3 [shape = 'u8[8192]{0}', space=vmem, size = 0x2000, scoped, tag = 'output window, operand 0']
    #allocation4 [shape = 's32[2]{0}', space=sflag, size = 0x8, scoped, tag = 'scoped memory for tpu_custom_call.1']
    #allocation5 [shape = 'u8[8192]{0}', space=vmem, size = 0x2000, scoped, tag = 'output window, operand 1']
    #allocation6 [shape = 's32[2]{0}', space=sflag, size = 0x8, scoped, tag = 'scoped memory for tpu_custom_call.1']
    %13 = vsyncpa [#allocation4], 0
    %s14 = scalar_lea.sflag [#allocation4], 1
    %15 = vsyncpa %s14, 0
    %16 = vsyncpa [#allocation6], 0
    %s17 = scalar_lea.sflag [#allocation6], 1
    %18 = vsyncpa %s17, 0
    loop: start=0, step=1, limit=10
    $region2: #{tpu_custom_call.1} parent=1 // loop_pre_header
      _
    $region3: #{tpu_custom_call.1} parent=1 // loop_header
      %s20 = sphi 0, %s24
      %p21 = scmp.ge.s32.totalorder %s20, 10
      %s27 = sphi 0, %s39
      %s28 = sphi 0, %s35
      %s29 = sphi 0, %s27
      %s30 = sphi 0, %s28
      %s31 = sphi 0, %s29
      %s32 = sphi 0, %s30
      %s42 = sphi 0, %s44
      %s45 = sphi 0, %s42
      %s46 = sphi 0, %s45
      %s62 = sphi 0, %s46
      %s68 = sphi 0, %s70
      %s71 = sphi 0, %s68
      %s72 = sphi 0, %s71
      %s88 = sphi 0, %s72
      %s94 = sphi 0, %s96
      %s97 = sphi 0, %s94
      %s98 = sphi 0, %s97
      %s114 = sphi 0, %s98
      %s120 = sphi 0, %s122
      %s123 = sphi 0, %s120
      %s124 = sphi 0, %s123
      %s140 = sphi 0, %s124
      %s146 = sphi 0, %s148
      %s149 = sphi 0, %s146
      %s150 = sphi 0, %s149
      %s166 = sphi 0, %s150
      %s170 = sphi 0, %s170
      %s172 = sphi 0, %s170
      %s173 = sphi 0, %s172
      %s187 = sphi 0, %s173
      %s193 = sphi 0, %s195
      %s196 = sphi 0, %s193
      %s197 = sphi 0, %s196
      %s213 = sphi 0, %s197
      %s221 = sphi 0, %s223
      %s224 = sphi 0, %s221
      %s225 = sphi 0, %s224
      %s241 = sphi 0, %s225
    $region4: #{tpu_custom_call.1} parent=1 // loop_header_branch
      %23 = sbr.rel (%p21) target = $region8
    $region5: #{tpu_custom_call.1} parent=1 // loop_body
      %s25 = ssub.s32 %s20, 1
      %s26 = ssub.s32 %s20, 2
      %s33 = sadd.s32 1, %s28
      %p34 = scmp.ge.s32.totalorder %s33, 4
      %s35 = scalar_select %p34, 0, %s33
      %s36 = sadd.s32 1, %s27
      %s37 = scalar_select %p34, %s36, %s27
      %p38 = scmp.ge.s32.totalorder %s37, 2
      %s39 = scalar_select %p38, 0, %s37
      %s40 = ssub.s32 %s27, %s39
      %p41 = scmp.eq.s32.totalorder %s40, 0
      %s43 = sadd.s32 %s42, 1
      %s44 = scalar_select %p41, %s42, %s43
      %p47 = pneg %p41
      %p48 = scmp.eq.s32.totalorder %s20, 7
      %p49 = por %p47, %p48
      %p50 = scmp.ne.s32.totalorder %s42, %s45
      %p51 = scmp.eq.s32.totalorder %s20, 0
      %p52 = por %p50, %p51
      %p53 = scmp.ne.s32.totalorder %s42, %s45
      %p54 = scmp.eq.s32.totalorder %s25, 7
      %p55 = por %p53, %p54
      %p56 = scmp.ne.s32.totalorder %s45, %s46
      %p57 = scmp.eq.s32.totalorder %s25, 0
      %p58 = por %p56, %p57
      %p59 = scmp.ne.s32.totalorder %s45, %s46
      %p60 = scmp.eq.s32.totalorder %s26, 7
      %p61 = por %p59, %p60
      %p63 = scmp.ne.s32.totalorder %s46, %s62
      %p64 = scmp.eq.s32.totalorder %s26, 0
      %p65 = por %p63, %p64
      %s66 = ssub.s32 %s27, %s39
      %p67 = scmp.eq.s32.totalorder %s66, 0
      %s69 = sadd.s32 %s68, 1
      %s70 = scalar_select %p67, %s68, %s69
      %p73 = pneg %p67
      %p74 = scmp.eq.s32.totalorder %s20, 7
      %p75 = por %p73, %p74
      %p76 = scmp.ne.s32.totalorder %s68, %s71
      %p77 = scmp.eq.s32.totalorder %s20, 0
      %p78 = por %p76, %p77
      %p79 = scmp.ne.s32.totalorder %s68, %s71
      %p80 = scmp.eq.s32.totalorder %s25, 7
      %p81 = por %p79, %p80
      %p82 = scmp.ne.s32.totalorder %s71, %s72
      %p83 = scmp.eq.s32.totalorder %s25, 0
      %p84 = por %p82, %p83
      %p85 = scmp.ne.s32.totalorder %s71, %s72
      %p86 = scmp.eq.s32.totalorder %s26, 7
      %p87 = por %p85, %p86
      %p89 = scmp.ne.s32.totalorder %s72, %s88
      %p90 = scmp.eq.s32.totalorder %s26, 0
      %p91 = por %p89, %p90
      %s92 = ssub.s32 %s28, %s35
      %p93 = scmp.eq.s32.totalorder %s92, 0
      %s95 = sadd.s32 %s94, 1
      %s96 = scalar_select %p93, %s94, %s95
      %p99 = pneg %p93
      %p100 = scmp.eq.s32.totalorder %s20, 7
      %p101 = por %p99, %p100
      %p102 = scmp.ne.s32.totalorder %s94, %s97
      %p103 = scmp.eq.s32.totalorder %s20, 0
      %p104 = por %p102, %p103
      %p105 = scmp.ne.s32.totalorder %s94, %s97
      %p106 = scmp.eq.s32.totalorder %s25, 7
      %p107 = por %p105, %p106
      %p108 = scmp.ne.s32.totalorder %s97, %s98
      %p109 = scmp.eq.s32.totalorder %s25, 0
      %p110 = por %p108, %p109
      %p111 = scmp.ne.s32.totalorder %s97, %s98
      %p112 = scmp.eq.s32.totalorder %s26, 7
      %p113 = por %p111, %p112
      %p115 = scmp.ne.s32.totalorder %s98, %s114
      %p116 = scmp.eq.s32.totalorder %s26, 0
      %p117 = por %p115, %p116
      %s118 = ssub.s32 %s28, %s35
      %p119 = scmp.eq.s32.totalorder %s118, 0
      %s121 = sadd.s32 %s120, 1
      %s122 = scalar_select %p119, %s120, %s121
      %p125 = pneg %p119
      %p126 = scmp.eq.s32.totalorder %s20, 7
      %p127 = por %p125, %p126
      %p128 = scmp.ne.s32.totalorder %s120, %s123
      %p129 = scmp.eq.s32.totalorder %s20, 0
      %p130 = por %p128, %p129
      %p131 = scmp.ne.s32.totalorder %s120, %s123
      %p132 = scmp.eq.s32.totalorder %s25, 7
      %p133 = por %p131, %p132
      %p134 = scmp.ne.s32.totalorder %s123, %s124
      %p135 = scmp.eq.s32.totalorder %s25, 0
      %p136 = por %p134, %p135
      %p137 = scmp.ne.s32.totalorder %s123, %s124
      %p138 = scmp.eq.s32.totalorder %s26, 7
      %p139 = por %p137, %p138
      %p141 = scmp.ne.s32.totalorder %s124, %s140
      %p142 = scmp.eq.s32.totalorder %s26, 0
      %p143 = por %p141, %p142
      %s144 = ssub.s32 %s28, %s35
      %p145 = scmp.eq.s32.totalorder %s144, 0
      %s147 = sadd.s32 %s146, 1
      %s148 = scalar_select %p145, %s146, %s147
      %p151 = pneg %p145
      %p152 = scmp.eq.s32.totalorder %s20, 7
      %p153 = por %p151, %p152
      %p154 = scmp.ne.s32.totalorder %s146, %s149
      %p155 = scmp.eq.s32.totalorder %s20, 0
      %p156 = por %p154, %p155
      %p157 = scmp.ne.s32.totalorder %s146, %s149
      %p158 = scmp.eq.s32.totalorder %s25, 7
      %p159 = por %p157, %p158
      %p160 = scmp.ne.s32.totalorder %s149, %s150
      %p161 = scmp.eq.s32.totalorder %s25, 0
      %p162 = por %p160, %p161
      %p163 = scmp.ne.s32.totalorder %s149, %s150
      %p164 = scmp.eq.s32.totalorder %s26, 7
      %p165 = por %p163, %p164
      %p167 = scmp.ne.s32.totalorder %s150, %s166
      %p168 = scmp.eq.s32.totalorder %s26, 0
      %p169 = por %p167, %p168
      %s171 = sadd.s32 %s170, 1
      %p174 = scmp.eq.s32.totalorder %s20, 7
      %p175 = scmp.ne.s32.totalorder %s170, %s172
      %p176 = scmp.eq.s32.totalorder %s20, 0
      %p177 = por %p175, %p176
      %p178 = scmp.ne.s32.totalorder %s170, %s172
      %p179 = scmp.eq.s32.totalorder %s25, 7
      %p180 = por %p178, %p179
      %p181 = scmp.ne.s32.totalorder %s172, %s173
      %p182 = scmp.eq.s32.totalorder %s25, 0
      %p183 = por %p181, %p182
      %p184 = scmp.ne.s32.totalorder %s172, %s173
      %p185 = scmp.eq.s32.totalorder %s26, 7
      %p186 = por %p184, %p185
      %p188 = scmp.ne.s32.totalorder %s173, %s187
      %p189 = scmp.eq.s32.totalorder %s26, 0
      %p190 = por %p188, %p189
      %s191 = ssub.s32 %s27, %s39
      %p192 = scmp.eq.s32.totalorder %s191, 0
      %s194 = sadd.s32 %s193, 1
      %s195 = scalar_select %p192, %s193, %s194
      %p198 = pneg %p192
      %p199 = scmp.eq.s32.totalorder %s20, 7
      %p200 = por %p198, %p199
      %p201 = scmp.ne.s32.totalorder %s193, %s196
      %p202 = scmp.eq.s32.totalorder %s20, 0
      %p203 = por %p201, %p202
      %p204 = scmp.ne.s32.totalorder %s193, %s196
      %p205 = scmp.eq.s32.totalorder %s25, 7
      %p206 = por %p204, %p205
      %p207 = scmp.ne.s32.totalorder %s196, %s197
      %p208 = scmp.eq.s32.totalorder %s25, 0
      %p209 = por %p207, %p208
      %p210 = scmp.ne.s32.totalorder %s196, %s197
      %p211 = scmp.eq.s32.totalorder %s26, 7
      %p212 = por %p210, %p211
      %p214 = scmp.ne.s32.totalorder %s197, %s213
      %p215 = scmp.eq.s32.totalorder %s26, 0
      %p216 = por %p214, %p215
      %s217 = ssub.s32 %s27, %s39
      %s218 = ssub.s32 %s28, %s35
      %s219 = sor.u32 %s217, %s218
      %p220 = scmp.eq.s32.totalorder %s219, 0
      %s222 = sadd.s32 %s221, 1
      %s223 = scalar_select %p220, %s221, %s222
      %p226 = pneg %p220
      %p227 = scmp.eq.s32.totalorder %s20, 7
      %p228 = por %p226, %p227
      %p229 = scmp.ne.s32.totalorder %s221, %s224
      %p230 = scmp.eq.s32.totalorder %s20, 0
      %p231 = por %p229, %p230
      %p232 = scmp.ne.s32.totalorder %s221, %s224
      %p233 = scmp.eq.s32.totalorder %s25, 7
      %p234 = por %p232, %p233
      %p235 = scmp.ne.s32.totalorder %s224, %s225
      %p236 = scmp.eq.s32.totalorder %s25, 0
      %p237 = por %p235, %p236
      %p238 = scmp.ne.s32.totalorder %s224, %s225
      %p239 = scmp.eq.s32.totalorder %s26, 7
      %p240 = por %p238, %p239
      %p242 = scmp.ne.s32.totalorder %s225, %s241
      %p243 = scmp.eq.s32.totalorder %s26, 0
      %p244 = por %p242, %p243
      %p245 = scmp.le.s32.totalorder 1, %s20
      %p246 = scmp.lt.s32.totalorder %s20, 9
      %p247 = pnand %p245, %p246
      %p248 = pneg %p247
      // Predicated region
      $region9: #{tpu_custom_call.1} parent=5 // pred_check
        _
      $region10: #{tpu_custom_call.1} parent=5 // pred_check_branch
        %250 = sbr.rel (%p247) target = $region12
      $region11: #{tpu_custom_call.1} parent=5 // pred_region
        %s251 = ssub.s32 %s20, 1
        // Predicated region
        $region13: #{tpu_custom_call.1} parent=11 // pred_check
          %p252 = pneg %p183
        $region14: #{tpu_custom_call.1} parent=11 // pred_check_branch
          %254 = sbr.rel (%p252) target = $region16
        $region15: #{tpu_custom_call.1} parent=11 // pred_region
          _
        $region16: #{tpu_custom_call.1} parent=11 // pred_fallthru
          _
      $region12: #{tpu_custom_call.1} parent=5 // pred_fallthru
        _
      %p255 = scmp.lt.s32.totalorder %s20, 8
      // Predicated region
      $region17: #{tpu_custom_call.1} parent=5 // pred_check
        %p256 = pneg %p255
      $region18: #{tpu_custom_call.1} parent=5 // pred_check_branch
        %258 = sbr.rel (%p256) target = $region20
      $region19: #{tpu_custom_call.1} parent=5 // pred_region
        // Predicated region
        $region21: #{tpu_custom_call.1} parent=19 // pred_check
          %p259 = pneg %p52
        $region22: #{tpu_custom_call.1} parent=19 // pred_check_branch
          %261 = sbr.rel (%p259) target = $region24
        $region23: #{tpu_custom_call.1} parent=19 // pred_region
          %p262 = scmp.lt.s32.totalorder %s27, 1
          %s263 = scalar_select %p262, %s27, 1
          %s264 = smul.addr %s263, 8
          %s265 = scalar_lea.vmem %s0, %s264
        $region24: #{tpu_custom_call.1} parent=19 // pred_fallthru
          _
        // Predicated region
        $region25: #{tpu_custom_call.1} parent=19 // pred_check
          %p266 = pneg %p78
        $region26: #{tpu_custom_call.1} parent=19 // pred_check_branch
          %268 = sbr.rel (%p266) target = $region28
        $region27: #{tpu_custom_call.1} parent=19 // pred_region
          %p269 = scmp.lt.s32.totalorder %s27, 1
          %s270 = scalar_select %p269, %s27, 1
          %s271 = smul.addr %s270, 8
          %s272 = scalar_lea.vmem %s1, %s271
        $region28: #{tpu_custom_call.1} parent=19 // pred_fallthru
          _
        // Predicated region
        $region29: #{tpu_custom_call.1} parent=19 // pred_check
          %p273 = pneg %p104
        $region30: #{tpu_custom_call.1} parent=19 // pred_check_branch
          %275 = sbr.rel (%p273) target = $region32
        $region31: #{tpu_custom_call.1} parent=19 // pred_region
          %p276 = scmp.lt.s32.totalorder %s28, 3
          %s277 = scalar_select %p276, %s28, 3
          %s278 = smul.addr %s277, 4
          %s279 = smul.addr %s278, 4
          %s280 = scalar_lea.vmem %s2, %s279
        $region32: #{tpu_custom_call.1} parent=19 // pred_fallthru
          _
        // Predicated region
        $region33: #{tpu_custom_call.1} parent=19 // pred_check
          %p281 = pneg %p130
        $region34: #{tpu_custom_call.1} parent=19 // pred_check_branch
          %283 = sbr.rel (%p281) target = $region36
        $region35: #{tpu_custom_call.1} parent=19 // pred_region
          %p284 = scmp.lt.s32.totalorder %s28, 3
          %s285 = scalar_select %p284, %s28, 3
          %s286 = scalar_lea.vmem %s3, %s285
        $region36: #{tpu_custom_call.1} parent=19 // pred_fallthru
          _
        // Predicated region
        $region37: #{tpu_custom_call.1} parent=19 // pred_check
          %p287 = pneg %p156
        $region38: #{tpu_custom_call.1} parent=19 // pred_check_branch
          %289 = sbr.rel (%p287) target = $region40
        $region39: #{tpu_custom_call.1} parent=19 // pred_region
          %p290 = scmp.lt.s32.totalorder %s28, 3
          %s291 = scalar_select %p290, %s28, 3
          %s292 = smul.addr %s291, 4
          %s293 = scalar_lea.vmem %s4, %s292
        $region40: #{tpu_custom_call.1} parent=19 // pred_fallthru
          _
      $region20: #{tpu_custom_call.1} parent=5 // pred_fallthru
        _
      %p294 = scmp.le.s32.totalorder 1, %s20
      %p295 = scmp.lt.s32.totalorder %s20, 9
      %p296 = pnand %p294, %p295
      %p297 = pneg %p296
      // Predicated region
      $region41: #{tpu_custom_call.1} parent=5 // pred_check
        _
      $region42: #{tpu_custom_call.1} parent=5 // pred_check_branch
        %299 = sbr.rel (%p296) target = $region44
      $region43: #{tpu_custom_call.1} parent=5 // pred_region
        %s300 = ssub.s32 %s20, 1
        %p301 = scmp.lt.s32.totalorder %s29, 1
        %s302 = scalar_select %p301, %s29, 1
        %s303 = smul.addr %s302, 8
        %s304 = scalar_lea.vmem %s0, %s303
        %p305 = pneg %p58
        %p306 = pneg %p55
        %p307 = scmp.lt.s32.totalorder %s29, 1
        %s308 = scalar_select %p307, %s29, 1
        %s309 = smul.addr %s308, 8
        %s310 = scalar_lea.vmem %s1, %s309
        %p311 = pneg %p84
        %p312 = pneg %p81
        %p313 = scmp.lt.s32.totalorder %s30, 3
        %s314 = scalar_select %p313, %s30, 3
        %s315 = smul.addr %s314, 4
        %s316 = smul.addr %s315, 4
        %s317 = scalar_lea.vmem %s2, %s316
        %p318 = pneg %p110
        %p319 = pneg %p107
        %p320 = scmp.lt.s32.totalorder %s30, 3
        %s321 = scalar_select %p320, %s30, 3
        %s322 = scalar_lea.vmem %s3, %s321
        %p323 = pneg %p136
        %p324 = pneg %p133
        %p325 = scmp.lt.s32.totalorder %s30, 3
        %s326 = scalar_select %p325, %s30, 3
        %s327 = smul.addr %s326, 4
        %s328 = scalar_lea.vmem %s4, %s327
        %p329 = pneg %p162
        %p330 = pneg %p159
        %p331 = pneg %p183
        %p332 = pneg %p180
        %p333 = pneg %p209
        %p334 = pneg %p206
        %s335 = sand.u32 %s196, 1
        %s336 = scalar_lea.sflag [#allocation4], %s335
        %s337 = sand.u32 %s196, 1
        %s338 = smul.addr %s337, 8
        %s339 = scalar_lea.vmem [#allocation3], %s338
        %p340 = pneg %p237
        %p341 = pneg %p234
        %s342 = sand.u32 %s224, 1
        %s343 = scalar_lea.sflag [#allocation6], %s342
        %s344 = sand.u32 %s224, 1
        %s345 = smul.addr %s344, 8
        %s346 = scalar_lea.vmem [#allocation5], %s345
        %p347 = scmp.lt.s32.totalorder %s29, 1
        %s348 = scalar_select %p347, %s29, 1
        %s349 = smul.addr %s348, 8
        %s350 = scalar_lea.vmem %s0, %s349
        %p351 = scmp.lt.s32.totalorder %s29, 1
        %s352 = scalar_select %p351, %s29, 1
        %s353 = smul.addr %s352, 8
        %s354 = scalar_lea.vmem %s1, %s353
        %p355 = scmp.lt.s32.totalorder %s30, 3
        %s356 = scalar_select %p355, %s30, 3
        %s357 = smul.addr %s356, 4
        %s358 = smul.addr %s357, 4
        %s359 = scalar_lea.vmem %s2, %s358
        %p360 = scmp.lt.s32.totalorder %s30, 3
        %s361 = scalar_select %p360, %s30, 3
        %s362 = scalar_lea.vmem %s3, %s361
        %p363 = scmp.lt.s32.totalorder %s30, 3
        %s364 = scalar_select %p363, %s30, 3
        %s365 = smul.addr %s364, 4
        %s366 = scalar_lea.vmem %s4, %s365
        %v368 = vld [vmem:[%s350] sm:$0xff]
        %v369 = vpack.c.bf16 %v368, %v368
        %v370 = vld [vmem:[%s359] sm:$0xf]
        %v371 = vld [vmem:[%s359 + $0x4] sm:$0xf]
        %v372 = vld [vmem:[%s359 + $0x8] sm:$0xf]
        %v373 = vld [vmem:[%s359 + $0xc] sm:$0xf]
        %v374 = vld [vmem:[%s362] sm:$0x1]
        %v376 = vlaneseq
        %v377 = vshrl.u32 %v376, 7
        %v378 = vsub.s32 0, %v377
        %v379 = vrot.slane %v374, %v378
        %v385 = vunpack.c.l.b16 %v370
        %v386 = vunpack.c.l.b16 %v371
        %v387 = vunpack.c.l.b16 %v372
        %v388 = vunpack.c.l.b16 %v373
        %v389 = vpack.c.b16 %v386, %v385
        %v390 = vpack.c.b16 %v388, %v387
        %vm393 = vcmask 261120
        %v395 = vsel %vm393, %v369, 0
        %397 = vmatprep.subr.bf16.mxu0 0
        %398 = vmatpush1.bf16.msra.mxu0 0
        %399 = vmatprep.subr.bf16.mxu0 0
        %400 = vmatpush1.bf16.msra.mxu0 0
        %401 = vmatprep.subr.bf16.mxu0 0
        %402 = vmatpush1.bf16.msra.mxu0 0
        %403 = vmatprep.subr.bf16.mxu0 0
        %404 = vmatpush1.bf16.msra.mxu0 0
        %405 = vmatprep.subr.bf16.mxu0 0
        %406 = vmatpush1.bf16.msra.mxu0 0
        %407 = vmatprep.subr.bf16.mxu0 0
        %408 = vmatpush1.bf16.msra.mxu0 0
        %409 = vmatprep.subr.bf16.mxu0 0
        %410 = vmatpush1.bf16.msra.mxu0 %v390
        %411 = vmatprep.subr.bf16.mxu0 0
        %412 = vmatpush1.bf16.msra.mxu0 %v389
        %413 = vmatprep.subr.bf16.mxu0 0
        %414 = vmatpush2.bf16.msra.mxu0 0
        %415 = vmatprep.subr.bf16.mxu0 0
        %416 = vmatpush2.bf16.msra.mxu0 0
        %417 = vmatprep.subr.bf16.mxu0 0
        %418 = vmatpush2.bf16.msra.mxu0 0
        %419 = vmatprep.subr.bf16.mxu0 0
        %420 = vmatpush2.bf16.msra.mxu0 0
        %421 = vmatprep.subr.bf16.mxu0 0
        %422 = vmatpush2.bf16.msra.mxu0 0
        %423 = vmatprep.subr.bf16.mxu0 0
        %424 = vmatpush2.bf16.msra.mxu0 0
        %425 = vmatprep.subr.bf16.mxu0 0
        %426 = vmatpush2.bf16.msra.mxu0 0
        %427 = vmatprep.subr.bf16.mxu0 0
        %428 = vmatpush2.bf16.msra.mxu0 0
        %429 = vmatprep.mubr.bf16.mxu0 0
        %430 = vmatmul.mubr.bf16.gmra.mxu0 %v395
        %v431 = vpop.f32.mrf.mxu0
        %v432 = vadd.f32 %v379, %v431
        %v433 = vpop.f32.mrf.mxu0
        %v434 = vpop.f32.mrf.mxu0
        %v435 = vpop.f32.mrf.mxu0
        %436 = vdwg.mxu0
        %v437 = vpack.c.bf16 %v432, %v432
        %439 = vrot.lane.b32.xlu0 %v437, 120
        %v440 = vpop.permute.xlu0 %439
        %vm441 = vcmask 64512
        %v443 = vsel %vm441, %v437, 0
        %v446 = vsel %vm441, %v440, 0
        %448 = vmatprep.subr.bf16.mxu0 0
        %449 = vmatpush1.bf16.xpose.msra.mxu0 0
        %450 = vmatprep.subr.bf16.mxu0 0
        %451 = vmatpush1.bf16.xpose.msra.mxu0 0
        %452 = vmatprep.subr.bf16.mxu0 0
        %453 = vmatpush1.bf16.xpose.msra.mxu0 0
        %454 = vmatprep.subr.bf16.mxu0 0
        %455 = vmatpush1.bf16.xpose.msra.mxu0 0
        %456 = vmatprep.subr.bf16.mxu0 0
        %457 = vmatpush1.bf16.xpose.msra.mxu0 0
        %458 = vmatprep.subr.bf16.mxu0 0
        %459 = vmatpush1.bf16.xpose.msra.mxu0 0
        %460 = vmatprep.subr.bf16.mxu0 0
        %461 = vmatpush1.bf16.xpose.msra.mxu0 0
        %462 = vmatprep.subr.bf16.mxu0 0
        %463 = vmatpush1.bf16.xpose.msra.mxu0 %v446
        %464 = vmatprep.subr.bf16.mxu0 0
        %465 = vmatpush2.bf16.xpose.msra.mxu0 0
        %466 = vmatprep.subr.bf16.mxu0 0
        %467 = vmatpush2.bf16.xpose.msra.mxu0 0
        %468 = vmatprep.subr.bf16.mxu0 0
        %469 = vmatpush2.bf16.xpose.msra.mxu0 0
        %470 = vmatprep.subr.bf16.mxu0 0
        %471 = vmatpush2.bf16.xpose.msra.mxu0 0
        %472 = vmatprep.subr.bf16.mxu0 0
        %473 = vmatpush2.bf16.xpose.msra.mxu0 0
        %474 = vmatprep.subr.bf16.mxu0 0
        %475 = vmatpush2.bf16.xpose.msra.mxu0 0
        %476 = vmatprep.subr.bf16.mxu0 0
        %477 = vmatpush2.bf16.xpose.msra.mxu0 0
        %478 = vmatprep.subr.bf16.mxu0 0
        %479 = vmatpush2.bf16.xpose.msra.mxu0 0
        %480 = vmatprep.mubr.bf16.mxu0 0
        %481 = vmatmul.mubr.bf16.gmra.mxu0 %v443
        %v482 = vpop.f32.mrf.mxu0
        %v483 = vadd.f32 0.0, %v482
        %v484 = vpop.f32.mrf.mxu0
        %v485 = vpop.f32.mrf.mxu0
        %v486 = vpop.f32.mrf.mxu0
        %487 = vdwg.mxu0
        %v488 = vsel %vm441, %v483, -inf
        %489 = vmax.xlane.f32.xlu0 %v488
        %v490 = vpop.xlane.xlu0 %489
        %v491 = vsub.f32 %v483, %v490
        %v492 = vmul.f32 %v491, 1.442695
        %v493 = vpow.pop %v492
        %v494 = vsel %vm441, %v493, 0.0
        %495 = vadd.xlane.f32.xlu0 %v494
        %v496 = vpop.xlane.xlu0 %495
        %v497 = vrcp.pop %v496
        %v498 = vmul.f32 %v493, %v497
        %499 = vst.msk [vmem:[%s346] sm:$0xff] %vm441, %v498
        %v500 = vpack.c.bf16 %v498, %v498
        %501 = vrot.lane.b32.xlu0 %v437, 112
        %v502 = vpop.permute.xlu0 %501
        %v504 = vsel %vm441, %v500, 0
        %vm506 = vcmask 1043456
        %v508 = vsel %vm506, %v502, 0
        %510 = vmatprep.subr.bf16.mxu0 0
        %511 = vmatpush1.bf16.msra.mxu0 0
        %512 = vmatprep.subr.bf16.mxu0 0
        %513 = vmatpush1.bf16.msra.mxu0 0
        %514 = vmatprep.subr.bf16.mxu0 0
        %515 = vmatpush1.bf16.msra.mxu0 0
        %516 = vmatprep.subr.bf16.mxu0 0
        %517 = vmatpush1.bf16.msra.mxu0 0
        %518 = vmatprep.subr.bf16.mxu0 0
        %519 = vmatpush1.bf16.msra.mxu0 0
        %520 = vmatprep.subr.bf16.mxu0 0
        %521 = vmatpush1.bf16.msra.mxu0 0
        %522 = vmatprep.subr.bf16.mxu0 0
        %523 = vmatpush1.bf16.msra.mxu0 0
        %524 = vmatprep.subr.bf16.mxu0 0
        %525 = vmatpush1.bf16.msra.mxu0 %v508
        %526 = vmatprep.subr.bf16.mxu0 0
        %527 = vmatpush2.bf16.msra.mxu0 0
        %528 = vmatprep.subr.bf16.mxu0 0
        %529 = vmatpush2.bf16.msra.mxu0 0
        %530 = vmatprep.subr.bf16.mxu0 0
        %531 = vmatpush2.bf16.msra.mxu0 0
        %532 = vmatprep.subr.bf16.mxu0 0
        %533 = vmatpush2.bf16.msra.mxu0 0
        %534 = vmatprep.subr.bf16.mxu0 0
        %535 = vmatpush2.bf16.msra.mxu0 0
        %536 = vmatprep.subr.bf16.mxu0 0
        %537 = vmatpush2.bf16.msra.mxu0 0
        %538 = vmatprep.subr.bf16.mxu0 0
        %539 = vmatpush2.bf16.msra.mxu0 0
        %540 = vmatprep.subr.bf16.mxu0 0
        %541 = vmatpush2.bf16.msra.mxu0 0
        %542 = vmatprep.mubr.bf16.mxu0 0
        %543 = vmatmul.mubr.bf16.gmra.mxu0 %v504
        %v544 = vpop.f32.mrf.mxu0
        %v545 = vadd.f32 0.0, %v544
        %v546 = vpop.f32.mrf.mxu0
        %v547 = vpop.f32.mrf.mxu0
        %v548 = vpop.f32.mrf.mxu0
        %549 = vdwg.mxu0
        %v550 = vpack.c.bf16 %v545, %v545
        %v551 = vld [vmem:[%s366] sm:$0xf]
        %v553 = vsel %vm441, %v550, 0
        %v556 = vsel %vm506, %v551, 0
        %558 = vmatprep.subr.bf16.mxu0 0
        %559 = vmatpush1.bf16.msra.mxu0 0
        %560 = vmatprep.subr.bf16.mxu0 0
        %561 = vmatpush1.bf16.msra.mxu0 0
        %562 = vmatprep.subr.bf16.mxu0 0
        %563 = vmatpush1.bf16.msra.mxu0 0
        %564 = vmatprep.subr.bf16.mxu0 0
        %565 = vmatpush1.bf16.msra.mxu0 0
        %566 = vmatprep.subr.bf16.mxu0 0
        %567 = vmatpush1.bf16.msra.mxu0 0
        %568 = vmatprep.subr.bf16.mxu0 0
        %569 = vmatpush1.bf16.msra.mxu0 0
        %570 = vmatprep.subr.bf16.mxu0 0
        %571 = vmatpush1.bf16.msra.mxu0 0
        %572 = vmatprep.subr.bf16.mxu0 0
        %573 = vmatpush1.bf16.msra.mxu0 %v556
        %574 = vmatprep.subr.bf16.mxu0 0
        %575 = vmatpush2.bf16.msra.mxu0 0
        %576 = vmatprep.subr.bf16.mxu0 0
        %577 = vmatpush2.bf16.msra.mxu0 0
        %578 = vmatprep.subr.bf16.mxu0 0
        %579 = vmatpush2.bf16.msra.mxu0 0
        %580 = vmatprep.subr.bf16.mxu0 0
        %581 = vmatpush2.bf16.msra.mxu0 0
        %582 = vmatprep.subr.bf16.mxu0 0
        %583 = vmatpush2.bf16.msra.mxu0 0
        %584 = vmatprep.subr.bf16.mxu0 0
        %585 = vmatpush2.bf16.msra.mxu0 0
        %586 = vmatprep.subr.bf16.mxu0 0
        %587 = vmatpush2.bf16.msra.mxu0 0
        %588 = vmatprep.subr.bf16.mxu0 0
        %589 = vmatpush2.bf16.msra.mxu0 0
        %590 = vmatprep.mubr.bf16.mxu0 0
        %591 = vmatmul.mubr.bf16.gmra.mxu0 %v553
        %v592 = vpop.f32.mrf.mxu0
        %v593 = vadd.f32 0.0, %v592
        %v594 = vpop.f32.mrf.mxu0
        %v595 = vpop.f32.mrf.mxu0
        %v596 = vpop.f32.mrf.mxu0
        %597 = vdwg.mxu0
        %p598 = scmp.eq.s32.totalorder %s30, 0
        // Predicated region
        $region45: #{tpu_custom_call.1} parent=43 // pred_check
          %p599 = pneg %p598
        $region46: #{tpu_custom_call.1} parent=43 // pred_check_branch
          %601 = sbr.rel (%p599) target = $region48
        $region47: #{tpu_custom_call.1} parent=43 // pred_region
          %v602 = vld [vmem:[%s354] sm:$0xff]
          %v603 = vld [vmem:[%s5] sm:$0x1]
          %v605 = vlaneseq
          %v606 = vshrl.u32 %v605, 7
          %v607 = vsub.s32 0, %v606
          %v608 = vrot.slane %v603, %v607
          %v610 = vadd.f32 %v602, %v608
          %611 = vst.msk [vmem:[#allocation2] sm:$0xff] %vm393, %v610
        $region48: #{tpu_custom_call.1} parent=43 // pred_fallthru
          _
        %v612 = vld [vmem:[#allocation2] sm:$0xff]
        %v613 = vadd.f32 %v612, %v593
        %614 = vst.msk [vmem:[#allocation2] sm:$0xff] %vm393, %v613
        %p615 = scmp.eq.s32.totalorder %s30, 3
        // Predicated region
        $region49: #{tpu_custom_call.1} parent=43 // pred_check
          %p616 = pneg %p615
        $region50: #{tpu_custom_call.1} parent=43 // pred_check_branch
          %618 = sbr.rel (%p616) target = $region52
        $region51: #{tpu_custom_call.1} parent=43 // pred_region
          %v619 = vld [vmem:[#allocation2] sm:$0xff]
          %620 = vst.msk [vmem:[%s339] sm:$0xff] %vm393, %v619
        $region52: #{tpu_custom_call.1} parent=43 // pred_fallthru
          _
        %s621 = sand.u32 %s196, 1
        %s622 = scalar_lea.sflag [#allocation4], %s621
        %s623 = sand.u32 %s196, 1
        %s624 = smul.addr %s623, 8
        %s625 = scalar_lea.vmem [#allocation3], %s624
        %s626 = sand.u32 %s224, 1
        %s627 = scalar_lea.sflag [#allocation6], %s626
        %s628 = sand.u32 %s224, 1
        %s629 = smul.addr %s628, 8
        %s630 = scalar_lea.vmem [#allocation5], %s629
        // Predicated region
        $region53: #{tpu_custom_call.1} parent=43 // pred_check
          %p631 = pneg %p206
        $region54: #{tpu_custom_call.1} parent=43 // pred_check_branch
          %633 = sbr.rel (%p631) target = $region56
        $region55: #{tpu_custom_call.1} parent=43 // pred_region
          %s635 = ssub.s32 128, 128
          %636 = vsyncadd %s622, %s635
          %s637 = smul.addr %s29, 128
          %s638 = scalar_lea.hbm %s6, %s637
          %s640 = sshll.u32 %s625, 4
          %s641 = int_to_ptr.vmem [resolvable:$true] %s640
          %643 = dma.vmem_to_hbm [thread:$0]  %s641, 128, %s638, %s622
        $region56: #{tpu_custom_call.1} parent=43 // pred_fallthru
          _
        // Predicated region
        $region57: #{tpu_custom_call.1} parent=43 // pred_check
          %p644 = pneg %p234
        $region58: #{tpu_custom_call.1} parent=43 // pred_check_branch
          %646 = sbr.rel (%p644) target = $region60
        $region59: #{tpu_custom_call.1} parent=43 // pred_region
          %s648 = ssub.s32 128, 128
          %649 = vsyncadd %s627, %s648
          %s650 = smul.addr %s29, 4
          %s651 = sadd.s32 %s30, %s650
          %s652 = smul.addr %s651, 128
          %s653 = scalar_lea.hbm %s7, %s652
          %s655 = sshll.u32 %s630, 4
          %s656 = int_to_ptr.vmem [resolvable:$true] %s655
          %658 = dma.vmem_to_hbm [thread:$0]  %s656, 128, %s653, %s627
        $region60: #{tpu_custom_call.1} parent=43 // pred_fallthru
          _
      $region44: #{tpu_custom_call.1} parent=5 // pred_fallthru
        _
      %p659 = scmp.le.s32.totalorder 2, %s20
      // Predicated region
      $region61: #{tpu_custom_call.1} parent=5 // pred_check
        %p660 = pneg %p659
      $region62: #{tpu_custom_call.1} parent=5 // pred_check_branch
        %662 = sbr.rel (%p660) target = $region64
      $region63: #{tpu_custom_call.1} parent=5 // pred_region
        %s663 = ssub.s32 %s20, 2
        // Predicated region
        $region65: #{tpu_custom_call.1} parent=63 // pred_check
          %p664 = pneg %p212
        $region66: #{tpu_custom_call.1} parent=63 // pred_check_branch
          %666 = sbr.rel (%p664) target = $region68
        $region67: #{tpu_custom_call.1} parent=63 // pred_region
          %s667 = sand.u32 %s197, 1
          %s668 = scalar_lea.sflag [#allocation4], %s667
          %s669 = sand.u32 %s197, 1
          %s670 = smul.addr %s669, 8
          %s671 = scalar_lea.vmem [#allocation3], %s670
          %672 = dma.done %s668, 128
        $region68: #{tpu_custom_call.1} parent=63 // pred_fallthru
          _
        // Predicated region
        $region69: #{tpu_custom_call.1} parent=63 // pred_check
          %p673 = pneg %p240
        $region70: #{tpu_custom_call.1} parent=63 // pred_check_branch
          %675 = sbr.rel (%p673) target = $region72
        $region71: #{tpu_custom_call.1} parent=63 // pred_region
          %s676 = sand.u32 %s225, 1
          %s677 = scalar_lea.sflag [#allocation6], %s676
          %s678 = sand.u32 %s225, 1
          %s679 = smul.addr %s678, 8
          %s680 = scalar_lea.vmem [#allocation5], %s679
          %681 = dma.done %s677, 128
        $region72: #{tpu_custom_call.1} parent=63 // pred_fallthru
          _
      $region64: #{tpu_custom_call.1} parent=5 // pred_fallthru
        _
    $region6: #{tpu_custom_call.1} parent=1 // loop_footer
      %s24 = sadd.s32 1, %s20
    $region7: #{tpu_custom_call.1} parent=1 // loop_footer_branch
      %19 = sbr.rel target = $region3
    $region8: #{tpu_custom_call.1} parent=1 // loop_exit
      _
    %682 = vsyncpa [#allocation4], 1
    %s683 = scalar_lea.sflag [#allocation4], 1
    %684 = vsyncpa %s683, 1
    %685 = vsyncpa [#allocation6], 1
    %s686 = scalar_lea.sflag [#allocation6], 1
    %687 = vsyncpa %s686, 1

</llo_original>
